<compile_context>
chip_gen: v7x
topology: tpu7x:2x2x1
jax: 0.10.0
libtpu: 0.0.40
codegen_flags: <defaults>
</compile_context>

<pallas_src>
import math

import jax
import jax.numpy as jnp
from jax.experimental import pallas as pl
from jax.experimental.pallas import tpu as pltpu


def _attention_kernel(v_ref, w_ref, b_ref, o_ref):
    # v_ref : (B_tile, seq, embed)   lane-dense, embed = heads*dim
    # w_ref : (embed, embed)         block-diagonal, block h = Wv.T (pre-transposed at setup)
    # b_ref : (1, embed)             tile(bv, heads)
    # o_ref : (B_tile, seq, embed)
    seq = v_ref.shape[1]
    v = v_ref[...].astype(jnp.float32)               # f32 accumulation even if input is bf16
    v_sum = jnp.sum(v, axis=1)                       # (B_tile, embed) — sublane reduce
    rows = jnp.dot(v_sum, w_ref[...].astype(jnp.float32),
                   preferred_element_type=jnp.float32)          # one batched MXU op
    rows = rows + b_ref[...].astype(jnp.float32) * float(seq)   # (B_tile, embed)
    # Result is identical across the q/seq axis; full shape is contractually required.
    o_ref[...] = jnp.broadcast_to(rows[:, None, :], o_ref.shape).astype(o_ref.dtype)


def prepare_attention_params(params, *, n_heads):
    """One-time parameter setup — hoisted out of the per-call forward path.

    Fuses the n_heads identical per-head (dim, dim) value projections into one
    lane-dense (embed, embed) block-diagonal matrix, pre-transposed so the
    kernel contains no in-kernel transpose.  Block h occupies rows/cols
    [h*dim, (h+1)*dim): head-major embed layout (embed index = h*dim + d),
    matching value.reshape(batch, seq, n_heads, dim) in the PyTorch module.
    """
    wv = params["wv"]            # (dim, dim)  PyTorch Linear weight, (out, in)
    bv = params["bv"]            # (dim,)
    dim = wv.shape[0]
    w_block = jnp.kron(jnp.eye(n_heads, dtype=wv.dtype), wv.T)       # (embed, embed)
    b_row = jnp.tile(bv, n_heads).reshape(1, n_heads * dim)          # (1, embed)
    return {"w_block": w_block, "b_row": b_row}


def attention_forward(key, query, value, prepared, *, n_heads, embed_dim):
    # key/query accepted for interface parity with the PyTorch module, but the
    # 'bqhk,bvhe->bqhe' einsum identity makes them irrelevant to the output.
    del key, query
    batch, seq, embed = value.shape
    dim = embed_dim // n_heads
    assert embed == n_heads * dim == embed_dim

    w_block = prepared["w_block"]     # (embed, embed)
    b_row = prepared["b_row"]         # (1, embed)

    # Largest batch tile (dividing batch) whose in+out double-buffered blocks
    # plus the resident weight stay well inside the v7x 32 MiB scoped-VMEM
    # default (also fine on v6e / v5e).
    itemsize = jnp.dtype(value.dtype).itemsize
    bytes_per_b = seq * embed * itemsize
    budget = 24 * 1024 * 1024
    b_tile = batch
    while b_tile > 1 and (4 * b_tile * bytes_per_b > budget or batch % b_tile != 0):
        b_tile -= 1
    grid = (batch // b_tile,)

    cost = pl.CostEstimate(
        flops=2 * batch * embed * embed + batch * seq * embed,
        transcendentals=0,
        bytes_accessed=(value.size + w_block.size + b_row.size
                        + batch * seq * embed) * itemsize,
    )

    return pl.pallas_call(
        _attention_kernel,
        out_shape=jax.ShapeDtypeStruct((batch, seq, embed), value.dtype),
        grid=grid,
        in_specs=[pl.BlockSpec((b_tile, seq, embed), lambda b: (b, 0, 0)),
                  pl.BlockSpec((embed, embed), lambda b: (0, 0)),
                  pl.BlockSpec((1, embed), lambda b: (0, 0))],
        out_specs=pl.BlockSpec((b_tile, seq, embed), lambda b: (b, 0, 0)),
        compiler_params=pltpu.CompilerParams(
            # One sizable block per step: a single-step grid stays on one TC;
            # for large batch the multi-MiB per-step blocks justify "parallel".
            dimension_semantics=("parallel",) if grid[0] > 1 else ("arbitrary",)),
        cost_estimate=cost,
    )(value, w_block, b_row)


def attention_ref(key, query, value, params, *, n_heads, embed_dim):
    """Pure-JAX reference mirroring the PyTorch forward line by line."""
    batch, seq, embed = key.shape
    dim = embed_dim // n_heads
    mk = key.reshape(batch, seq, n_heads, dim)
    mq = query.reshape(batch, seq, n_heads, dim)
    mv = value.reshape(batch, seq, n_heads, dim)
    ko = mk @ params["wk"].T + params["bk"]
    qo = mq @ params["wq"].T + params["bq"]
    vo = mv @ params["wv"].T + params["bv"]
    energy = jnp.einsum('bqhd,bkhd->bqhk', qo, ko)
    sm = jax.nn.softmax(energy / embed_dim ** 0.5, axis=3)
    attn = jnp.einsum('bqhk,bvhe->bqhe', sm, vo)
    return attn.reshape(batch, seq, -1)


if __name__ == "__main__":
    # Small shapes consistent with the module: embed = n_heads * dim (lane-dense 128)
    batch, seq = 2, 8
    n_heads, dim = 4, 32
    embed_dim = n_heads * dim  # 128

    root = jax.random.PRNGKey(0)
    k_q, k_k, k_v, k_p = jax.random.split(root, 4)

    query = jax.random.normal(k_q, (batch, seq, embed_dim), dtype=jnp.float32)
    key = jax.random.normal(k_k, (batch, seq, embed_dim), dtype=jnp.float32)
    value = jax.random.normal(k_v, (batch, seq, embed_dim), dtype=jnp.float32)

    # Deterministic params (nn.Linear(dim, dim) x 3: weight (dim, dim), bias (dim,))
    pw = jax.random.split(k_p, 6)
    lim = 1.0 / math.sqrt(dim)
    params = {
        "wq": jax.random.uniform(pw[0], (dim, dim), jnp.float32, -lim, lim),
        "bq": jax.random.uniform(pw[1], (dim,), jnp.float32, -lim, lim),
        "wk": jax.random.uniform(pw[2], (dim, dim), jnp.float32, -lim, lim),
        "bk": jax.random.uniform(pw[3], (dim,), jnp.float32, -lim, lim),
        "wv": jax.random.uniform(pw[4], (dim, dim), jnp.float32, -lim, lim),
        "bv": jax.random.uniform(pw[5], (dim,), jnp.float32, -lim, lim),
    }

    # One-time parameter setup (hoisted out of the per-call forward path).
    prepared = jax.tree.map(jax.block_until_ready,
                            prepare_attention_params(params, n_heads=n_heads))

    out = attention_forward(key, query, value, prepared,
                            n_heads=n_heads, embed_dim=embed_dim)
    out = jax.block_until_ready(out)

    ref = attention_ref(key, query, value, params,
                        n_heads=n_heads, embed_dim=embed_dim)
    assert out.shape == (batch, seq, embed_dim), out.shape
    assert jnp.allclose(out, ref, atol=1e-2, rtol=1e-2), \
        float(jnp.max(jnp.abs(out - ref)))

    print("KERNEL_OK")
</pallas_src>

<mosaic_0001>
module attributes {stable_mosaic.version = 11 : i64} {
  func.func @_attention_kernel(%arg0: i32, %arg1: memref<2x8x128xf32, #tpu.memory_space<vmem>>, %arg2: memref<128x128xf32, #tpu.memory_space<vmem>>, %arg3: memref<1x128xf32, #tpu.memory_space<vmem>>, %arg4: memref<2x8x128xf32, #tpu.memory_space<vmem>>) attributes {dimension_semantics = [#tpu.dimension_semantics<arbitrary>], iteration_bounds = array<i64: 1>, scalar_prefetch = 0 : i64, scratch_operands = 0 : i64, tpu.core_type = #tpu.core_type<tc>, window_params = [{transform_indices = @transform_0, window_bounds = array<i64: 2, 8, 128>}, {pipeline_mode = #tpu.pipeline_mode<synchronous>, transform_indices = @transform_1, window_bounds = array<i64: 128, 128>}, {pipeline_mode = #tpu.pipeline_mode<synchronous>, transform_indices = @transform_2, window_bounds = array<i64: 1, 128>}, {transform_indices = @transform_3, window_bounds = array<i64: 2, 8, 128>}]} {
    %c0 = arith.constant 0 : index
    %c0_0 = arith.constant 0 : index
    %c0_1 = arith.constant 0 : index
    %0 = vector.load %arg1[%c0, %c0_0, %c0_1] : memref<2x8x128xf32, #tpu.memory_space<vmem>>, vector<2x8x128xf32>
    %cst = arith.constant dense<0.000000e+00> : vector<2x128xf32>
    %1 = vector.multi_reduction <add>, %0, %cst [1] : vector<2x8x128xf32> to vector<2x128xf32>
    %c0_2 = arith.constant 0 : index
    %c0_3 = arith.constant 0 : index
    %2 = vector.load %arg2[%c0_2, %c0_3] : memref<128x128xf32, #tpu.memory_space<vmem>>, vector<128x128xf32>
    %cst_4 = arith.constant dense<0.000000e+00> : vector<2x128xf32>
    %3 = tpu.matmul %1, %2, %cst_4 {dimension_numbers = #tpu.dot_dimension_numbers<[1], [0], [0], [1], [0, 0, 1, 1], [], []>} : vector<2x128xf32>, vector<128x128xf32>, vector<2x128xf32> -> vector<2x128xf32>
    %c0_5 = arith.constant 0 : index
    %c0_6 = arith.constant 0 : index
    %4 = vector.load %arg3[%c0_5, %c0_6] : memref<1x128xf32, #tpu.memory_space<vmem>>, vector<1x128xf32>
    %cst_7 = arith.constant 8.000000e+00 : f32
    %5 = vector.broadcast %cst_7 : f32 to vector<1x128xf32>
    %6 = arith.mulf %4, %5 : vector<1x128xf32>
    %7 = vector.broadcast %6 : vector<1x128xf32> to vector<2x128xf32>
    %8 = arith.addf %3, %7 : vector<2x128xf32>
    %9 = vector.shape_cast %8 : vector<2x128xf32> to vector<2x1x128xf32>
    %10 = vector.shape_cast %9 : vector<2x1x128xf32> to vector<2x1x128xf32>
    %11 = vector.broadcast %10 : vector<2x1x128xf32> to vector<2x8x128xf32>
    %c0_8 = arith.constant 0 : index
    %c0_9 = arith.constant 0 : index
    %c0_10 = arith.constant 0 : index
    %12 = vector.load %arg4[%c0_8, %c0_9, %c0_10] : memref<2x8x128xf32, #tpu.memory_space<vmem>>, vector<2x8x128xf32>
    tpu.vector_store %arg4[%c0_8, %c0_9, %c0_10], %11 {strides = array<i32>} : memref<2x8x128xf32, #tpu.memory_space<vmem>>, vector<2x8x128xf32>,
    return
  }
  func.func @transform_0(%arg0: i32) -> (i32, i32, i32) {
    %c0_i32 = arith.constant 0 : i32
    %c0_i32_0 = arith.constant 0 : i32
    %c0_i32_1 = arith.constant 0 : i32
    return %arg0, %c0_i32, %c0_i32_0 : i32, i32, i32
  }
  func.func @transform_1(%arg0: i32) -> (i32, i32) {
    %c0_i32 = arith.constant 0 : i32
    %c0_i32_0 = arith.constant 0 : i32
    %c0_i32_1 = arith.constant 0 : i32
    return %c0_i32, %c0_i32_0 : i32, i32
  }
  func.func @transform_2(%arg0: i32) -> (i32, i32) {
    %c0_i32 = arith.constant 0 : i32
    %c0_i32_0 = arith.constant 0 : i32
    %c0_i32_1 = arith.constant 0 : i32
    return %c0_i32, %c0_i32_0 : i32, i32
  }
  func.func @transform_3(%arg0: i32) -> (i32, i32, i32) {
    %c0_i32 = arith.constant 0 : i32
    %c0_i32_0 = arith.constant 0 : i32
    %c0_i32_1 = arith.constant 0 : i32
    return %arg0, %c0_i32, %c0_i32_0 : i32, i32, i32
  }
}

</mosaic_0001>

<llo_original>
// kernel: tpu_custom_call.1
$region0: #{tpu_custom_call.1}
  #allocation0 [shape = 'u32[]', space=smem, size = 0x4, offset = 0x4, fixed_abs, tag = 'smem constant byte address 0x4 - core index']
  #allocation1 [shape = 'u32[144,128]{1,0:T(1,128)}', space=vmem, size = 0x12000, scoped, tag = 'internal scratch']
  %s0 = inlined_call_operand.hbm [shape: f32[2,8,128], index: 0, kind: input, shape index: {}]
  %s1 = inlined_call_operand.hbm [shape: f32[128,128], index: 1, kind: input, shape index: {}]
  %s2 = inlined_call_operand.vmem [shape: f32[1,128], index: 2, kind: input, shape index: {}]
  %s3 = inlined_call_operand.hbm [shape: f32[2,8,128], index: 3, kind: output, shape index: {}]
  %s4 = sld [smem:[#allocation0]]
  $region30: #{tpu_custom_call.1} parent=0
    _
  %s6 = ssub.s32 1, %s4
  %s7 = scalar_select 0, %s6, %s4
  $region1: #{tpu_custom_call.1} parent=0
    #allocation2 [shape = 'u8[8192]{0}', space=vmem, size = 0x2000, scoped, tag = 'input window, operand 0, single buffered']
    #allocation3 [shape = 's32[1]{0}', space=sflag, size = 0x4, scoped, tag = 'scoped memory for tpu_custom_call.1']
    #allocation4 [shape = 's32[1]{0}', space=sflag, size = 0x4, scoped, tag = 'scoped memory for tpu_custom_call.1']
    #allocation5 [shape = 'u8[65536]{0}', space=vmem, size = 0x10000, scoped, tag = 'input window, operand 1, single buffered']
    #allocation6 [shape = 's32[1]{0}', space=sflag, size = 0x4, scoped, tag = 'scoped memory for tpu_custom_call.1']
    #allocation7 [shape = 'u8[8192]{0}', space=vmem, size = 0x2000, scoped, tag = 'output window, operand 0, single buffered']
    %8 = vsyncpa [#allocation3], 0
    %9 = vsyncpa [#allocation6], 0
    %10 = vsyncpa [#allocation4], 0
    // Predicated region
    $region2: #{tpu_custom_call.1} parent=1 // pred_check
      _
    $region3: #{tpu_custom_call.1} parent=1 // pred_check_branch
      %12 = sbr.rel (0) target = $region5
    $region4: #{tpu_custom_call.1} parent=1 // pred_region
      %s14 = ssub.s32 256, 256
      %15 = vsyncadd [#allocation3], %s14
      %s16 = sshll.u32 [#allocation2], 4
      %s17 = int_to_ptr.vmem [resolvable:$true] %s16
      %22 = dma.hbm_to_vmem [thread:$0]  %s0, 256, %s17, [#allocation3], 128, 128, 8
    $region5: #{tpu_custom_call.1} parent=1 // pred_fallthru
      _
    // Predicated region
    $region6: #{tpu_custom_call.1} parent=1 // pred_check
      _
    $region7: #{tpu_custom_call.1} parent=1 // pred_check_branch
      %24 = sbr.rel (0) target = $region9
    $region8: #{tpu_custom_call.1} parent=1 // pred_region
      %s26 = ssub.s32 2048, 2048
      %27 = vsyncadd [#allocation6], %s26
      %s28 = sshll.u32 [#allocation5], 4
      %s29 = int_to_ptr.vmem [resolvable:$true] %s28
      %34 = dma.hbm_to_vmem [thread:$0]  %s1, 2048, %s29, [#allocation6], 128, 128, 8
    $region9: #{tpu_custom_call.1} parent=1 // pred_fallthru
      _
    // Predicated region
    $region10: #{tpu_custom_call.1} parent=1 // pred_check
      _
    $region11: #{tpu_custom_call.1} parent=1 // pred_check_branch
      %36 = sbr.rel (0) target = $region13
    $region12: #{tpu_custom_call.1} parent=1 // pred_region
      _
    $region13: #{tpu_custom_call.1} parent=1 // pred_fallthru
      _
    // Predicated region
    $region14: #{tpu_custom_call.1} parent=1 // pred_check
      _
    $region15: #{tpu_custom_call.1} parent=1 // pred_check_branch
      %38 = sbr.rel (0) target = $region17
    $region16: #{tpu_custom_call.1} parent=1 // pred_region
      %39 = dma.done [#allocation3], 256
    $region17: #{tpu_custom_call.1} parent=1 // pred_fallthru
      _
    // Predicated region
    $region18: #{tpu_custom_call.1} parent=1 // pred_check
      _
    $region19: #{tpu_custom_call.1} parent=1 // pred_check_branch
      %41 = sbr.rel (0) target = $region21
    $region20: #{tpu_custom_call.1} parent=1 // pred_region
      %42 = dma.done [#allocation6], 2048
    $region21: #{tpu_custom_call.1} parent=1 // pred_fallthru
      _
    %v43 = vld [vmem:[#allocation2] sm:$0xff]
    %v44 = vld [vmem:[#allocation2 + $0x8] sm:$0xff]
    %v45 = vrot.slane %v43, 4
    %v46 = vadd.f32 %v43, %v45
    %v47 = vrot.slane %v46, 2
    %v48 = vadd.f32 %v46, %v47
    %v49 = vrot.slane %v48, 1
    %v50 = vadd.f32 %v48, %v49
    %v51 = vrot.slane %v44, 4
    %v52 = vadd.f32 %v44, %v51
    %v53 = vrot.slane %v52, 2
    %v54 = vadd.f32 %v52, %v53
    %v55 = vrot.slane %v54, 1
    %v56 = vadd.f32 %v54, %v55
    %v57 = vld [vmem:[#allocation5] sm:$0xff]
    %v58 = vld [vmem:[#allocation5 + $0x8] sm:$0xff]
    %v59 = vld [vmem:[#allocation5 + $0x10] sm:$0xff]
    %v60 = vld [vmem:[#allocation5 + $0x18] sm:$0xff]
    %v61 = vld [vmem:[#allocation5 + $0x20] sm:$0xff]
    %v62 = vld [vmem:[#allocation5 + $0x28] sm:$0xff]
    %v63 = vld [vmem:[#allocation5 + $0x30] sm:$0xff]
    %v64 = vld [vmem:[#allocation5 + $0x38] sm:$0xff]
    %v65 = vld [vmem:[#allocation5 + $0x40] sm:$0xff]
    %v66 = vld [vmem:[#allocation5 + $0x48] sm:$0xff]
    %v67 = vld [vmem:[#allocation5 + $0x50] sm:$0xff]
    %v68 = vld [vmem:[#allocation5 + $0x58] sm:$0xff]
    %v69 = vld [vmem:[#allocation5 + $0x60] sm:$0xff]
    %v70 = vld [vmem:[#allocation5 + $0x68] sm:$0xff]
    %v71 = vld [vmem:[#allocation5 + $0x70] sm:$0xff]
    %v72 = vld [vmem:[#allocation5 + $0x78] sm:$0xff]
    %v73 = vld [vmem:[%s2] sm:$0x1]
    %v74 = vmul.f32 %v73, 8.0
    %v76 = vlaneseq
    %v77 = vshrl.u32 %v76, 7
    %v78 = vsub.s32 0, %v77
    %v79 = vrot.slane %v74, %v78
    %vm83 = vcmask 1041409
    %v84 = vsel %vm83, %v56, %v50
    %86 = vmatprep.subr.mxu0 0.0
    %87 = vmatpush1.msra.mxu0 %v57
    %88 = vmatprep.subr.mxu0 0.0
    %89 = vmatpush1.msra.mxu0 %v58
    %90 = vmatprep.subr.mxu0 0.0
    %91 = vmatpush1.msra.mxu0 %v59
    %92 = vmatprep.subr.mxu0 0.0
    %93 = vmatpush1.msra.mxu0 %v60
    %94 = vmatprep.subr.mxu0 0.0
    %95 = vmatpush1.msra.mxu0 %v61
    %96 = vmatprep.subr.mxu0 0.0
    %97 = vmatpush1.msra.mxu0 %v62
    %98 = vmatprep.subr.mxu0 0.0
    %99 = vmatpush1.msra.mxu0 %v63
    %100 = vmatprep.subr.mxu0 0.0
    %101 = vmatpush1.msra.mxu0 %v64
    %102 = vmatprep.subr.mxu0 0.0
    %103 = vmatpush1.msra.mxu0 %v65
    %104 = vmatprep.subr.mxu0 0.0
    %105 = vmatpush1.msra.mxu0 %v66
    %106 = vmatprep.subr.mxu0 0.0
    %107 = vmatpush1.msra.mxu0 %v67
    %108 = vmatprep.subr.mxu0 0.0
    %109 = vmatpush1.msra.mxu0 %v68
    %110 = vmatprep.subr.mxu0 0.0
    %111 = vmatpush1.msra.mxu0 %v69
    %112 = vmatprep.subr.mxu0 0.0
    %113 = vmatpush1.msra.mxu0 %v70
    %114 = vmatprep.subr.mxu0 0.0
    %115 = vmatpush1.msra.mxu0 %v71
    %116 = vmatprep.subr.mxu0 0.0
    %117 = vmatpush1.msra.mxu0 %v72
    %118 = vmatprep.subr.mxu0 0.0
    %119 = vmatpush1.msra.mxu0 0.0
    %120 = vmatprep.subr.mxu0 0.0
    %121 = vmatpush1.msra.mxu0 0.0
    %122 = vmatprep.subr.mxu0 0.0
    %123 = vmatpush1.msra.mxu0 0.0
    %124 = vmatprep.subr.mxu0 0.0
    %125 = vmatpush1.msra.mxu0 0.0
    %126 = vmatprep.subr.mxu0 0.0
    %127 = vmatpush1.msra.mxu0 0.0
    %128 = vmatprep.subr.mxu0 0.0
    %129 = vmatpush1.msra.mxu0 0.0
    %130 = vmatprep.subr.mxu0 0.0
    %131 = vmatpush1.msra.mxu0 0.0
    %132 = vmatprep.subr.mxu0 0.0
    %133 = vmatpush1.msra.mxu0 0.0
    %134 = vmatprep.subr.mxu0 0.0
    %135 = vmatpush1.msra.mxu0 0.0
    %136 = vmatprep.subr.mxu0 0.0
    %137 = vmatpush1.msra.mxu0 0.0
    %138 = vmatprep.subr.mxu0 0.0
    %139 = vmatpush1.msra.mxu0 0.0
    %140 = vmatprep.subr.mxu0 0.0
    %141 = vmatpush1.msra.mxu0 0.0
    %142 = vmatprep.subr.mxu0 0.0
    %143 = vmatpush1.msra.mxu0 0.0
    %144 = vmatprep.subr.mxu0 0.0
    %145 = vmatpush1.msra.mxu0 0.0
    %146 = vmatprep.subr.mxu0 0.0
    %147 = vmatpush1.msra.mxu0 0.0
    %148 = vmatprep.subr.mxu0 0.0
    %149 = vmatpush1.msra.mxu0 0.0
    %150 = vmatprep.mubr.f32.mxu0 0.0
    %151 = vmatmul.mubr.f32.gmra.mrb[0].mxu0 %v84
    %v152 = vpop.f32.mrb[0].mxu0
    %v153 = vadd.f32 %v79, %v152
    %v154 = vpop.f32.mrb[0].mxu0
    %155 = vdwg.mxu0
    %v158 = vunpack.c.l.s4 1966171168
    %v159 = vunpack.c.0.s8 %v158
    %v160 = vlaneseq
    %v161 = vshrl.u32 %v160, 7
    %v162 = vsub.s32 %v159, %v161
    %v163 = vrot.slane %v153, %v162
    %v164 = vcombine.high %v163, %v163
    %v166 = vunpack.c.l.s4 1966171168
    %v167 = vunpack.c.0.s8 %v166
    %v168 = vlaneseq
    %v169 = vshrl.u32 %v168, 7
    %v170 = vsub.s32 %v167, %v169
    %v171 = vrot.slane %v163, %v170
    %v173 = vunpack.c.l.s4 1966171168
    %v174 = vunpack.c.0.s8 %v173
    %v175 = vlaneseq
    %v176 = vshrl.u32 %v175, 7
    %v177 = vsub.s32 %v174, %v176
    %v178 = vrot.slane %v164, %v177
    %v179 = vlaneseq
    %v180 = vshrl.u32 %v179, 7
    %v181 = vsub.s32 0, %v180
    %v182 = vrot.slane %v171, %v181
    %v183 = vlaneseq
    %v184 = vshrl.u32 %v183, 7
    %v185 = vsub.s32 0, %v184
    %v186 = vrot.slane %v178, %v185
    %189 = vst [vmem:[#allocation7] sm:$0xff] %v182
    %190 = vst [vmem:[#allocation7 + $0x8] sm:$0xff] %v186
    // Predicated region
    $region22: #{tpu_custom_call.1} parent=1 // pred_check
      _
    $region23: #{tpu_custom_call.1} parent=1 // pred_check_branch
      %192 = sbr.rel (0) target = $region25
    $region24: #{tpu_custom_call.1} parent=1 // pred_region
      %s194 = ssub.s32 256, 256
      %195 = vsyncadd [#allocation4], %s194
      %s196 = sshll.u32 [#allocation7], 4
      %s197 = int_to_ptr.vmem [resolvable:$true] %s196
      %202 = dma.vmem_to_hbm [thread:$0]  %s197, 256, %s3, [#allocation4], 128, 128, 8
    $region25: #{tpu_custom_call.1} parent=1 // pred_fallthru
      _
    // Predicated region
    $region26: #{tpu_custom_call.1} parent=1 // pred_check
      _
    $region27: #{tpu_custom_call.1} parent=1 // pred_check_branch
      %204 = sbr.rel (0) target = $region29
    $region28: #{tpu_custom_call.1} parent=1 // pred_region
      %205 = dma.done [#allocation4], 256
    $region29: #{tpu_custom_call.1} parent=1 // pred_fallthru
      _
    %206 = vsyncpa [#allocation3], 1
    %207 = vsyncpa [#allocation6], 1
    %208 = vsyncpa [#allocation4], 1

</llo_original>
